<compile_context>
chip_gen: v7x
topology: tpu7x:2x2x1
jax: 0.10.0
libtpu: 0.0.40
codegen_flags: <defaults>
</compile_context>

<pallas_src>
import functools

import jax
import jax.numpy as jnp
from jax import lax
from jax.experimental import pallas as pl
from jax.experimental.pallas import tpu as pltpu


def _default_tanh_bf16():
    """bf16 tanh only where the EUP supports bf16 (v6e / v7x)."""
    try:
        kind = jax.devices()[0].device_kind.lower()
    except Exception:  # pragma: no cover - defensive
        return False
    return ("v6" in kind) or ("v7" in kind)


def _mlp_logits(s_ref, w1_ref, b1_ref, w2_ref, b2_ref, *, tanh_bf16):
    """Shared MLP body, transposed orientation (batch on lanes).

    Returns logits of shape (act_dims, bt)."""
    # h_T = tanh(W1 @ s_tile^T + b1): contract the obs axis of BOTH operands so
    # no transpose is materialized anywhere.                    -> (hidden, bt)
    pre = lax.dot_general(
        w1_ref[...], s_ref[...],
        dimension_numbers=(((1,), (1,)), ((), ())),
        preferred_element_type=jnp.float32,
    ) + b1_ref[...]
    if tanh_bf16:
        # EUP bf16 tanh (v6e/v7x): ~2x throughput, error << softmax tolerance.
        h_t = jnp.tanh(pre.astype(jnp.bfloat16)).astype(jnp.float32)
    else:
        h_t = jnp.tanh(pre)

    # logits_T = W2 @ h_T + b2; batch stays on lanes (MXU N = bt). -> (act, bt)
    return lax.dot_general(
        w2_ref[...], h_t,
        dimension_numbers=(((1,), (0,)), ((), ())),
        preferred_element_type=jnp.float32,
    ) + b2_ref[...]


def _actor_small_kernel(s_ref, w1_ref, b1_ref, w2_ref, b2_ref, out_ref, *,
                        tanh_bf16):
    """Single-tile fast path: whole batch in one tile, plain dim-0 softmax."""
    logits_t = _mlp_logits(s_ref, w1_ref, b1_ref, w2_ref, b2_ref,
                           tanh_bf16=tanh_bf16)
    m = jnp.max(logits_t, axis=1, keepdims=True)            # (act, 1)
    e = jnp.exp(logits_t - m)
    l = jnp.sum(e, axis=1, keepdims=True)
    out_ref[...] = e * pl.reciprocal(l, approx=True)         # EUP slot


def _actor_tile_kernel(s_ref, w1_ref, b1_ref, w2_ref, b2_ref,
                       e_ref, m_ref, l_ref, *, true_b, batch_tile, tanh_bf16):
    """Tiled path: each grid step is independent (split softmax).

    Emits per-tile un-normalized exp() plus per-tile (max, sum); the combine
    and normalization happen in the wrapper."""
    t = pl.program_id(0)

    logits_t = _mlp_logits(s_ref, w1_ref, b1_ref, w2_ref, b2_ref,
                           tanh_bf16=tanh_bf16)              # (act, bt)

    if true_b % batch_tile != 0:
        # Only the trailing tile is padded.  Single mask to -inf: exp() of the
        # padded columns is exactly 0, so they drop out of both m_t and l_t
        # (every tile contains >= 1 valid column, so m_t stays finite).
        col = t * batch_tile + lax.broadcasted_iota(jnp.int32, logits_t.shape, 1)
        logits_t = jnp.where(col < true_b, logits_t, -jnp.inf)

    m_t = jnp.max(logits_t, axis=1, keepdims=True)           # (act, 1)
    e_t = jnp.exp(logits_t - m_t)                            # (act, bt)
    l_t = jnp.sum(e_t, axis=1, keepdims=True)                # (act, 1)

    e_ref[0] = e_t
    m_ref[0] = m_t
    l_ref[0] = l_t


def actor_forward(s, w1, b1, w2, b2, *, batch_tile=1024, tanh_bf16=None):
    """s: (B, obs_dims).  w1: (256, obs_dims), b1: (256,),
    w2: (act_dims, 256), b2: (act_dims,).  Returns (B, act_dims) with softmax
    taken over dim 0 (the batch), matching F.softmax(net(s), dim=0)."""
    B, obs_dims = s.shape
    hidden = w1.shape[0]
    act_dims = w2.shape[0]

    if tanh_bf16 is None:
        tanh_bf16 = _default_tanh_bf16()

    # Column-vector biases (broadcast over the lane/batch axis); ~1 KiB reshape.
    b1c = b1.reshape(hidden, 1)
    b2c = b2.reshape(act_dims, 1)

    if B <= batch_tile:
        # --- Fast path (the shape the RL loop actually uses): one tile, no
        # padding, no online-softmax bookkeeping. --------------------------
        kernel = functools.partial(_actor_small_kernel, tanh_bf16=tanh_bf16)
        out_t = pl.pallas_call(
            kernel,
            out_shape=jax.ShapeDtypeStruct((act_dims, B), jnp.float32),
            grid=(1,),
            in_specs=[
                pl.BlockSpec((B, obs_dims), lambda i: (0, 0)),
                pl.BlockSpec((hidden, obs_dims), lambda i: (0, 0)),
                pl.BlockSpec((hidden, 1), lambda i: (0, 0)),
                pl.BlockSpec((act_dims, hidden), lambda i: (0, 0)),
                pl.BlockSpec((act_dims, 1), lambda i: (0, 0)),
            ],
            out_specs=pl.BlockSpec((act_dims, B), lambda i: (0, 0)),
            compiler_params=pltpu.CompilerParams(
                dimension_semantics=("arbitrary",)),
        )(s, w1, b1c, w2, b2c)
        return out_t.T                                        # (B, act)

    # --- Tiled path: B > batch_tile. --------------------------------------
    assert batch_tile % 128 == 0, "batch_tile must be a multiple of 128"
    bt = batch_tile
    num_tiles = pl.cdiv(B, bt)
    b_pad = num_tiles * bt
    if b_pad != B:
        s = jnp.pad(s, ((0, b_pad - B), (0, 0)))

    kernel = functools.partial(_actor_tile_kernel, true_b=B, batch_tile=bt,
                               tanh_bf16=tanh_bf16)

    e_t, m_t, l_t = pl.pallas_call(
        kernel,
        out_shape=(
            jax.ShapeDtypeStruct((num_tiles, act_dims, bt), jnp.float32),
            jax.ShapeDtypeStruct((num_tiles, act_dims, 1), jnp.float32),
            jax.ShapeDtypeStruct((num_tiles, act_dims, 1), jnp.float32),
        ),
        grid=(num_tiles,),
        in_specs=[
            pl.BlockSpec((bt, obs_dims), lambda t: (t, 0)),      # s: streamed
            pl.BlockSpec((hidden, obs_dims), lambda t: (0, 0)),  # W1: resident
            pl.BlockSpec((hidden, 1), lambda t: (0, 0)),         # b1
            pl.BlockSpec((act_dims, hidden), lambda t: (0, 0)),  # W2: resident
            pl.BlockSpec((act_dims, 1), lambda t: (0, 0)),       # b2
        ],
        out_specs=[
            # Streamed (written once per tile) -> linear in batch, no resident
            # accumulator, no per-step whole-output rescale.
            pl.BlockSpec((1, act_dims, bt), lambda t: (t, 0, 0)),
            pl.BlockSpec((1, act_dims, 1), lambda t: (t, 0, 0)),
            pl.BlockSpec((1, act_dims, 1), lambda t: (t, 0, 0)),
        ],
        compiler_params=pltpu.CompilerParams(
            # Tiles are independent now -> both v7x TensorCores can share the
            # batch axis (neutral on single-TC v5e/v6e).
            dimension_semantics=("parallel",)),
    )(s, w1, b1c, w2, b2c)

    # Deferred split-softmax combine + normalization; tiny elementwise work
    # fused by XLA with the layout fixup below.
    m_fin = jnp.max(m_t, axis=0, keepdims=True)                       # (1, act, 1)
    l_fin = jnp.sum(l_t * jnp.exp(m_t - m_fin), axis=0, keepdims=True)
    corr = jnp.exp(m_t - m_fin) / l_fin                               # (tiles, act, 1)

    # (num_tiles, act, bt) -> (B, act).  Padded columns have e == 0 and are
    # sliced away anyway.
    probs = jnp.transpose(e_t * corr, (0, 2, 1)).reshape(b_pad, act_dims)
    return probs[:B]


def reference_forward(s, w1, b1, w2, b2):
    h = jnp.tanh(s @ w1.T + b1)
    logits = h @ w2.T + b2
    return jax.nn.softmax(logits, axis=0)


if __name__ == "__main__":
    obs_dims, act_dims, hidden = 32, 4, 256

    key = jax.random.PRNGKey(0)
    k_w1, k_b1, k_w2, k_b2, k_s1, k_s2, k_s3 = jax.random.split(key, 7)

    # PyTorch-Linear-style uniform init, PyTorch layouts (no pre-transpose).
    bound1 = 1.0 / (obs_dims ** 0.5)
    bound2 = 1.0 / (hidden ** 0.5)
    w1 = jax.random.uniform(k_w1, (hidden, obs_dims), jnp.float32, -bound1, bound1)
    b1 = jax.random.uniform(k_b1, (hidden,), jnp.float32, -bound1, bound1)
    w2 = jax.random.uniform(k_w2, (act_dims, hidden), jnp.float32, -bound2, bound2)
    b2 = jax.random.uniform(k_b2, (act_dims,), jnp.float32, -bound2, bound2)

    fwd = jax.jit(actor_forward, static_argnames=("batch_tile", "tanh_bf16"))

    # Case 1: small batch — the RL inference shape, single-tile fast path.
    s_small = jax.random.normal(k_s1, (8, obs_dims), jnp.float32)
    out_small = jax.block_until_ready(fwd(s_small, w1, b1, w2, b2))
    ref_small = reference_forward(s_small, w1, b1, w2, b2)
    assert out_small.shape == (8, act_dims)
    assert jnp.allclose(out_small, ref_small, atol=5e-3, rtol=5e-3), "small-batch mismatch"
    assert jnp.allclose(out_small.sum(axis=0), 1.0, atol=2e-2), "small-batch softmax not normalized"

    # Case 2: tiled, non-multiple batch — exercises the parallel batch grid,
    # the split dim-0 softmax, and the padded-column masking.
    s_big = jax.random.normal(k_s2, (600, obs_dims), jnp.float32)
    out_big = jax.block_until_ready(fwd(s_big, w1, b1, w2, b2, batch_tile=256))
    ref_big = reference_forward(s_big, w1, b1, w2, b2)
    assert out_big.shape == (600, act_dims)
    assert jnp.allclose(out_big, ref_big, atol=5e-3, rtol=5e-3), "tiled-batch mismatch"
    assert jnp.allclose(out_big.sum(axis=0), 1.0, atol=2e-2), "tiled-batch softmax not normalized"

    # Case 3: default 1024 tile, non-multiple batch (2 tiles, trailing padding).
    s_def = jax.random.normal(k_s3, (1500, obs_dims), jnp.float32)
    out_def = jax.block_until_ready(fwd(s_def, w1, b1, w2, b2))
    ref_def = reference_forward(s_def, w1, b1, w2, b2)
    assert out_def.shape == (1500, act_dims)
    assert jnp.allclose(out_def, ref_def, atol=5e-3, rtol=5e-3), "default-tile mismatch"
    assert jnp.allclose(out_def.sum(axis=0), 1.0, atol=2e-2), "default-tile softmax not normalized"

    print("KERNEL_OK")
</pallas_src>

<mosaic_0001>
module attributes {stable_mosaic.version = 11 : i64} {
  func.func @_actor_small_kernel(%arg0: i32, %arg1: memref<8x32xf32, #tpu.memory_space<vmem>>, %arg2: memref<256x32xf32, #tpu.memory_space<vmem>>, %arg3: memref<256x1xf32, #tpu.memory_space<vmem>>, %arg4: memref<4x256xf32, #tpu.memory_space<vmem>>, %arg5: memref<4x1xf32, #tpu.memory_space<vmem>>, %arg6: memref<4x8xf32, #tpu.memory_space<vmem>>) attributes {dimension_semantics = [#tpu.dimension_semantics<arbitrary>], iteration_bounds = array<i64: 1>, scalar_prefetch = 0 : i64, scratch_operands = 0 : i64, tpu.core_type = #tpu.core_type<tc>, window_params = [{pipeline_mode = #tpu.pipeline_mode<synchronous>, transform_indices = @transform_0, window_bounds = array<i64: 8, 32>}, {pipeline_mode = #tpu.pipeline_mode<synchronous>, transform_indices = @transform_1, window_bounds = array<i64: 256, 32>}, {pipeline_mode = #tpu.pipeline_mode<synchronous>, transform_indices = @transform_2, window_bounds = array<i64: 256, 1>}, {pipeline_mode = #tpu.pipeline_mode<synchronous>, transform_indices = @transform_3, window_bounds = array<i64: 4, 256>}, {pipeline_mode = #tpu.pipeline_mode<synchronous>, transform_indices = @transform_4, window_bounds = array<i64: 4, 1>}, {pipeline_mode = #tpu.pipeline_mode<synchronous>, transform_indices = @transform_5, window_bounds = array<i64: 4, 8>}]} {
    %c0 = arith.constant 0 : index
    %c0_0 = arith.constant 0 : index
    %0 = vector.load %arg2[%c0, %c0_0] : memref<256x32xf32, #tpu.memory_space<vmem>>, vector<256x32xf32>
    %c0_1 = arith.constant 0 : index
    %c0_2 = arith.constant 0 : index
    %1 = vector.load %arg1[%c0_1, %c0_2] : memref<8x32xf32, #tpu.memory_space<vmem>>, vector<8x32xf32>
    %cst = arith.constant dense<0.000000e+00> : vector<256x8xf32>
    %2 = tpu.matmul %0, %1, %cst {dimension_numbers = #tpu.dot_dimension_numbers<[1], [1], [0], [0], [0, 0, 1, 0], [], []>} : vector<256x32xf32>, vector<8x32xf32>, vector<256x8xf32> -> vector<256x8xf32>
    %c0_3 = arith.constant 0 : index
    %c0_4 = arith.constant 0 : index
    %3 = vector.load %arg3[%c0_3, %c0_4] : memref<256x1xf32, #tpu.memory_space<vmem>>, vector<256x1xf32>
    %4 = vector.broadcast %3 : vector<256x1xf32> to vector<256x8xf32>
    %5 = arith.addf %2, %4 : vector<256x8xf32>
    %6 = math.tanh %5 : vector<256x8xf32>
    %c0_5 = arith.constant 0 : index
    %c0_6 = arith.constant 0 : index
    %7 = vector.load %arg4[%c0_5, %c0_6] : memref<4x256xf32, #tpu.memory_space<vmem>>, vector<4x256xf32>
    %cst_7 = arith.constant dense<0.000000e+00> : vector<4x8xf32>
    %8 = tpu.matmul %7, %6, %cst_7 {dimension_numbers = #tpu.dot_dimension_numbers<[1], [0], [0], [1], [0, 0, 1, 1], [], []>} : vector<4x256xf32>, vector<256x8xf32>, vector<4x8xf32> -> vector<4x8xf32>
    %c0_8 = arith.constant 0 : index
    %c0_9 = arith.constant 0 : index
    %9 = vector.load %arg5[%c0_8, %c0_9] : memref<4x1xf32, #tpu.memory_space<vmem>>, vector<4x1xf32>
    %10 = vector.broadcast %9 : vector<4x1xf32> to vector<4x8xf32>
    %11 = arith.addf %8, %10 : vector<4x8xf32>
    %cst_10 = arith.constant dense<0xFF800000> : vector<4xf32>
    %12 = vector.multi_reduction <maximumf>, %11, %cst_10 [1] : vector<4x8xf32> to vector<4xf32>
    %13 = vector.shape_cast %12 : vector<4xf32> to vector<4x1xf32>
    %14 = vector.broadcast %13 : vector<4x1xf32> to vector<4x8xf32>
    %15 = arith.subf %11, %14 : vector<4x8xf32>
    %16 = math.exp %15 : vector<4x8xf32>
    %cst_11 = arith.constant dense<0.000000e+00> : vector<4xf32>
    %17 = vector.multi_reduction <add>, %16, %cst_11 [1] : vector<4x8xf32> to vector<4xf32>
    %18 = vector.shape_cast %17 : vector<4xf32> to vector<4x1xf32>
    %19 = tpu.reciprocal %18 {approx = true} : vector<4x1xf32> -> vector<4x1xf32>
    %20 = vector.broadcast %19 : vector<4x1xf32> to vector<4x8xf32>
    %21 = arith.mulf %16, %20 : vector<4x8xf32>
    %c0_12 = arith.constant 0 : index
    %c0_13 = arith.constant 0 : index
    %22 = vector.load %arg6[%c0_12, %c0_13] : memref<4x8xf32, #tpu.memory_space<vmem>>, vector<4x8xf32>
    tpu.vector_store %arg6[%c0_12, %c0_13], %21 {strides = array<i32>} : memref<4x8xf32, #tpu.memory_space<vmem>>, vector<4x8xf32>,
    return
  }
  func.func @transform_0(%arg0: i32) -> (i32, i32) {
    %c0_i32 = arith.constant 0 : i32
    %c0_i32_0 = arith.constant 0 : i32
    %c0_i32_1 = arith.constant 0 : i32
    return %c0_i32, %c0_i32_0 : i32, i32
  }
  func.func @transform_1(%arg0: i32) -> (i32, i32) {
    %c0_i32 = arith.constant 0 : i32
    %c0_i32_0 = arith.constant 0 : i32
    %c0_i32_1 = arith.constant 0 : i32
    return %c0_i32, %c0_i32_0 : i32, i32
  }
  func.func @transform_2(%arg0: i32) -> (i32, i32) {
    %c0_i32 = arith.constant 0 : i32
    %c0_i32_0 = arith.constant 0 : i32
    %c0_i32_1 = arith.constant 0 : i32
    return %c0_i32, %c0_i32_0 : i32, i32
  }
  func.func @transform_3(%arg0: i32) -> (i32, i32) {
    %c0_i32 = arith.constant 0 : i32
    %c0_i32_0 = arith.constant 0 : i32
    %c0_i32_1 = arith.constant 0 : i32
    return %c0_i32, %c0_i32_0 : i32, i32
  }
  func.func @transform_4(%arg0: i32) -> (i32, i32) {
    %c0_i32 = arith.constant 0 : i32
    %c0_i32_0 = arith.constant 0 : i32
    %c0_i32_1 = arith.constant 0 : i32
    return %c0_i32, %c0_i32_0 : i32, i32
  }
  func.func @transform_5(%arg0: i32) -> (i32, i32) {
    %c0_i32 = arith.constant 0 : i32
    %c0_i32_0 = arith.constant 0 : i32
    %c0_i32_1 = arith.constant 0 : i32
    return %c0_i32, %c0_i32_0 : i32, i32
  }
}

</mosaic_0001>

<llo_original>
// kernel: actor_forward.1
$region0: #{actor_forward.1}
  #allocation0 [shape = 'u32[]', space=smem, size = 0x4, offset = 0x4, fixed_abs, tag = 'smem constant byte address 0x4 - core index']
  #allocation1 [shape = 'u32[144,128]{1,0:T(1,128)}', space=vmem, size = 0x12000, scoped, tag = 'internal scratch']
  %s0 = inlined_call_operand.vmem [shape: f32[8,32], index: 0, kind: input, shape index: {}]
  %s1 = inlined_call_operand.vmem [shape: f32[256,32], index: 1, kind: input, shape index: {}]
  %s2 = inlined_call_operand.vmem [shape: f32[256,1], index: 2, kind: input, shape index: {}]
  %s3 = inlined_call_operand.vmem [shape: f32[4,256], index: 3, kind: input, shape index: {}]
  %s4 = inlined_call_operand.vmem [shape: f32[4,1], index: 4, kind: input, shape index: {}]
  %s5 = inlined_call_operand.hbm [shape: f32[4,8], index: 5, kind: output, shape index: {}]
  %s6 = sld [smem:[#allocation0]]
  $region30: #{actor_forward.1} parent=0
    _
  %s8 = ssub.s32 1, %s6
  %s9 = scalar_select 0, %s8, %s6
  $region1: #{actor_forward.1} parent=0
    #allocation2 [shape = 'u8[2048]{0}', space=vmem, size = 0x800, scoped, tag = 'output window, operand 0, single buffered']
    #allocation3 [shape = 's32[1]{0}', space=sflag, size = 0x4, scoped, tag = 'scoped memory for actor_forward.1']
    %10 = vsyncpa [#allocation3], 0
    // Predicated region
    $region2: #{actor_forward.1} parent=1 // pred_check
      _
    $region3: #{actor_forward.1} parent=1 // pred_check_branch
      %12 = sbr.rel (0) target = $region5
    $region4: #{actor_forward.1} parent=1 // pred_region
      _
    $region5: #{actor_forward.1} parent=1 // pred_fallthru
      _
    // Predicated region
    $region6: #{actor_forward.1} parent=1 // pred_check
      _
    $region7: #{actor_forward.1} parent=1 // pred_check_branch
      %14 = sbr.rel (0) target = $region9
    $region8: #{actor_forward.1} parent=1 // pred_region
      _
    $region9: #{actor_forward.1} parent=1 // pred_fallthru
      _
    // Predicated region
    $region10: #{actor_forward.1} parent=1 // pred_check
      _
    $region11: #{actor_forward.1} parent=1 // pred_check_branch
      %16 = sbr.rel (0) target = $region13
    $region12: #{actor_forward.1} parent=1 // pred_region
      _
    $region13: #{actor_forward.1} parent=1 // pred_fallthru
      _
    // Predicated region
    $region14: #{actor_forward.1} parent=1 // pred_check
      _
    $region15: #{actor_forward.1} parent=1 // pred_check_branch
      %18 = sbr.rel (0) target = $region17
    $region16: #{actor_forward.1} parent=1 // pred_region
      _
    $region17: #{actor_forward.1} parent=1 // pred_fallthru
      _
    // Predicated region
    $region18: #{actor_forward.1} parent=1 // pred_check
      _
    $region19: #{actor_forward.1} parent=1 // pred_check_branch
      %20 = sbr.rel (0) target = $region21
    $region20: #{actor_forward.1} parent=1 // pred_region
      _
    $region21: #{actor_forward.1} parent=1 // pred_fallthru
      _
    %v21 = vld [vmem:[%s1] sm:$0xff]
    %v22 = vld [vmem:[%s1 + $0x8] sm:$0xff]
    %v23 = vld [vmem:[%s1 + $0x10] sm:$0xff]
    %v24 = vld [vmem:[%s1 + $0x18] sm:$0xff]
    %v25 = vld [vmem:[%s1 + $0x20] sm:$0xff]
    %v26 = vld [vmem:[%s1 + $0x28] sm:$0xff]
    %v27 = vld [vmem:[%s1 + $0x30] sm:$0xff]
    %v28 = vld [vmem:[%s1 + $0x38] sm:$0xff]
    %v29 = vld [vmem:[%s1 + $0x40] sm:$0xff]
    %v30 = vld [vmem:[%s1 + $0x48] sm:$0xff]
    %v31 = vld [vmem:[%s1 + $0x50] sm:$0xff]
    %v32 = vld [vmem:[%s1 + $0x58] sm:$0xff]
    %v33 = vld [vmem:[%s1 + $0x60] sm:$0xff]
    %v34 = vld [vmem:[%s1 + $0x68] sm:$0xff]
    %v35 = vld [vmem:[%s1 + $0x70] sm:$0xff]
    %v36 = vld [vmem:[%s1 + $0x78] sm:$0xff]
    %v37 = vld [vmem:[%s1 + $0x80] sm:$0xff]
    %v38 = vld [vmem:[%s1 + $0x88] sm:$0xff]
    %v39 = vld [vmem:[%s1 + $0x90] sm:$0xff]
    %v40 = vld [vmem:[%s1 + $0x98] sm:$0xff]
    %v41 = vld [vmem:[%s1 + $0xa0] sm:$0xff]
    %v42 = vld [vmem:[%s1 + $0xa8] sm:$0xff]
    %v43 = vld [vmem:[%s1 + $0xb0] sm:$0xff]
    %v44 = vld [vmem:[%s1 + $0xb8] sm:$0xff]
    %v45 = vld [vmem:[%s1 + $0xc0] sm:$0xff]
    %v46 = vld [vmem:[%s1 + $0xc8] sm:$0xff]
    %v47 = vld [vmem:[%s1 + $0xd0] sm:$0xff]
    %v48 = vld [vmem:[%s1 + $0xd8] sm:$0xff]
    %v49 = vld [vmem:[%s1 + $0xe0] sm:$0xff]
    %v50 = vld [vmem:[%s1 + $0xe8] sm:$0xff]
    %v51 = vld [vmem:[%s1 + $0xf0] sm:$0xff]
    %v52 = vld [vmem:[%s1 + $0xf8] sm:$0xff]
    %v53 = vld [vmem:[%s0] sm:$0xff]
    %v54 = vld [vmem:[%s2] sm:$0xff]
    %v55 = vld [vmem:[%s2 + $0x8] sm:$0xff]
    %v56 = vld [vmem:[%s2 + $0x10] sm:$0xff]
    %v57 = vld [vmem:[%s2 + $0x18] sm:$0xff]
    %v58 = vld [vmem:[%s2 + $0x20] sm:$0xff]
    %v59 = vld [vmem:[%s2 + $0x28] sm:$0xff]
    %v60 = vld [vmem:[%s2 + $0x30] sm:$0xff]
    %v61 = vld [vmem:[%s2 + $0x38] sm:$0xff]
    %v62 = vld [vmem:[%s2 + $0x40] sm:$0xff]
    %v63 = vld [vmem:[%s2 + $0x48] sm:$0xff]
    %v64 = vld [vmem:[%s2 + $0x50] sm:$0xff]
    %v65 = vld [vmem:[%s2 + $0x58] sm:$0xff]
    %v66 = vld [vmem:[%s2 + $0x60] sm:$0xff]
    %v67 = vld [vmem:[%s2 + $0x68] sm:$0xff]
    %v68 = vld [vmem:[%s2 + $0x70] sm:$0xff]
    %v69 = vld [vmem:[%s2 + $0x78] sm:$0xff]
    %v70 = vld [vmem:[%s2 + $0x80] sm:$0xff]
    %v71 = vld [vmem:[%s2 + $0x88] sm:$0xff]
    %v72 = vld [vmem:[%s2 + $0x90] sm:$0xff]
    %v73 = vld [vmem:[%s2 + $0x98] sm:$0xff]
    %v74 = vld [vmem:[%s2 + $0xa0] sm:$0xff]
    %v75 = vld [vmem:[%s2 + $0xa8] sm:$0xff]
    %v76 = vld [vmem:[%s2 + $0xb0] sm:$0xff]
    %v77 = vld [vmem:[%s2 + $0xb8] sm:$0xff]
    %v78 = vld [vmem:[%s2 + $0xc0] sm:$0xff]
    %v79 = vld [vmem:[%s2 + $0xc8] sm:$0xff]
    %v80 = vld [vmem:[%s2 + $0xd0] sm:$0xff]
    %v81 = vld [vmem:[%s2 + $0xd8] sm:$0xff]
    %v82 = vld [vmem:[%s2 + $0xe0] sm:$0xff]
    %v83 = vld [vmem:[%s2 + $0xe8] sm:$0xff]
    %v84 = vld [vmem:[%s2 + $0xf0] sm:$0xff]
    %v85 = vld [vmem:[%s2 + $0xf8] sm:$0xff]
    %87 = vset.pattern.permute.xlu0 0
    %88 = vperm.xlu0 %87, %v54
    %v89 = vpop.permute.xlu0 %88
    %92 = vset.pattern.permute.xlu0 0
    %93 = vperm.xlu0 %92, %v55
    %v94 = vpop.permute.xlu0 %93
    %97 = vset.pattern.permute.xlu0 0
    %98 = vperm.xlu0 %97, %v56
    %v99 = vpop.permute.xlu0 %98
    %102 = vset.pattern.permute.xlu0 0
    %103 = vperm.xlu0 %102, %v57
    %v104 = vpop.permute.xlu0 %103
    %107 = vset.pattern.permute.xlu0 0
    %108 = vperm.xlu0 %107, %v58
    %v109 = vpop.permute.xlu0 %108
    %112 = vset.pattern.permute.xlu0 0
    %113 = vperm.xlu0 %112, %v59
    %v114 = vpop.permute.xlu0 %113
    %117 = vset.pattern.permute.xlu0 0
    %118 = vperm.xlu0 %117, %v60
    %v119 = vpop.permute.xlu0 %118
    %122 = vset.pattern.permute.xlu0 0
    %123 = vperm.xlu0 %122, %v61
    %v124 = vpop.permute.xlu0 %123
    %127 = vset.pattern.permute.xlu0 0
    %128 = vperm.xlu0 %127, %v62
    %v129 = vpop.permute.xlu0 %128
    %132 = vset.pattern.permute.xlu0 0
    %133 = vperm.xlu0 %132, %v63
    %v134 = vpop.permute.xlu0 %133
    %137 = vset.pattern.permute.xlu0 0
    %138 = vperm.xlu0 %137, %v64
    %v139 = vpop.permute.xlu0 %138
    %142 = vset.pattern.permute.xlu0 0
    %143 = vperm.xlu0 %142, %v65
    %v144 = vpop.permute.xlu0 %143
    %147 = vset.pattern.permute.xlu0 0
    %148 = vperm.xlu0 %147, %v66
    %v149 = vpop.permute.xlu0 %148
    %152 = vset.pattern.permute.xlu0 0
    %153 = vperm.xlu0 %152, %v67
    %v154 = vpop.permute.xlu0 %153
    %157 = vset.pattern.permute.xlu0 0
    %158 = vperm.xlu0 %157, %v68
    %v159 = vpop.permute.xlu0 %158
    %162 = vset.pattern.permute.xlu0 0
    %163 = vperm.xlu0 %162, %v69
    %v164 = vpop.permute.xlu0 %163
    %167 = vset.pattern.permute.xlu0 0
    %168 = vperm.xlu0 %167, %v70
    %v169 = vpop.permute.xlu0 %168
    %172 = vset.pattern.permute.xlu0 0
    %173 = vperm.xlu0 %172, %v71
    %v174 = vpop.permute.xlu0 %173
    %177 = vset.pattern.permute.xlu0 0
    %178 = vperm.xlu0 %177, %v72
    %v179 = vpop.permute.xlu0 %178
    %182 = vset.pattern.permute.xlu0 0
    %183 = vperm.xlu0 %182, %v73
    %v184 = vpop.permute.xlu0 %183
    %187 = vset.pattern.permute.xlu0 0
    %188 = vperm.xlu0 %187, %v74
    %v189 = vpop.permute.xlu0 %188
    %192 = vset.pattern.permute.xlu0 0
    %193 = vperm.xlu0 %192, %v75
    %v194 = vpop.permute.xlu0 %193
    %197 = vset.pattern.permute.xlu0 0
    %198 = vperm.xlu0 %197, %v76
    %v199 = vpop.permute.xlu0 %198
    %202 = vset.pattern.permute.xlu0 0
    %203 = vperm.xlu0 %202, %v77
    %v204 = vpop.permute.xlu0 %203
    %207 = vset.pattern.permute.xlu0 0
    %208 = vperm.xlu0 %207, %v78
    %v209 = vpop.permute.xlu0 %208
    %212 = vset.pattern.permute.xlu0 0
    %213 = vperm.xlu0 %212, %v79
    %v214 = vpop.permute.xlu0 %213
    %217 = vset.pattern.permute.xlu0 0
    %218 = vperm.xlu0 %217, %v80
    %v219 = vpop.permute.xlu0 %218
    %222 = vset.pattern.permute.xlu0 0
    %223 = vperm.xlu0 %222, %v81
    %v224 = vpop.permute.xlu0 %223
    %227 = vset.pattern.permute.xlu0 0
    %228 = vperm.xlu0 %227, %v82
    %v229 = vpop.permute.xlu0 %228
    %232 = vset.pattern.permute.xlu0 0
    %233 = vperm.xlu0 %232, %v83
    %v234 = vpop.permute.xlu0 %233
    %237 = vset.pattern.permute.xlu0 0
    %238 = vperm.xlu0 %237, %v84
    %v239 = vpop.permute.xlu0 %238
    %242 = vset.pattern.permute.xlu0 0
    %243 = vperm.xlu0 %242, %v85
    %v244 = vpop.permute.xlu0 %243
    %vm246 = vcmask 261120
    %v248 = vsel %vm246, %v21, 0
    %v251 = vsel %vm246, %v22, 0
    %v254 = vsel %vm246, %v23, 0
    %v257 = vsel %vm246, %v24, 0
    %v260 = vsel %vm246, %v25, 0
    %v263 = vsel %vm246, %v26, 0
    %v266 = vsel %vm246, %v27, 0
    %v269 = vsel %vm246, %v28, 0
    %v272 = vsel %vm246, %v29, 0
    %v275 = vsel %vm246, %v30, 0
    %v278 = vsel %vm246, %v31, 0
    %v281 = vsel %vm246, %v32, 0
    %v284 = vsel %vm246, %v33, 0
    %v287 = vsel %vm246, %v34, 0
    %v290 = vsel %vm246, %v35, 0
    %v293 = vsel %vm246, %v36, 0
    %v296 = vsel %vm246, %v37, 0
    %v299 = vsel %vm246, %v38, 0
    %v302 = vsel %vm246, %v39, 0
    %v305 = vsel %vm246, %v40, 0
    %v308 = vsel %vm246, %v41, 0
    %v311 = vsel %vm246, %v42, 0
    %v314 = vsel %vm246, %v43, 0
    %v317 = vsel %vm246, %v44, 0
    %v320 = vsel %vm246, %v45, 0
    %v323 = vsel %vm246, %v46, 0
    %v326 = vsel %vm246, %v47, 0
    %v329 = vsel %vm246, %v48, 0
    %v332 = vsel %vm246, %v49, 0
    %v335 = vsel %vm246, %v50, 0
    %v338 = vsel %vm246, %v51, 0
    %v341 = vsel %vm246, %v52, 0
    %v344 = vsel %vm246, %v53, 0
    %346 = vmatprep.subr.mxu0 0.0
    %347 = vmatpush1.xpose.msra.mxu0 %v344
    %348 = vmatprep.subr.mxu0 0.0
    %349 = vmatpush1.xpose.msra.mxu0 0.0
    %350 = vmatprep.subr.mxu0 0.0
    %351 = vmatpush1.xpose.msra.mxu0 0.0
    %352 = vmatprep.subr.mxu0 0.0
    %353 = vmatpush1.xpose.msra.mxu0 0.0
    %354 = vmatprep.subr.mxu0 0.0
    %355 = vmatpush1.xpose.msra.mxu0 0.0
    %356 = vmatprep.subr.mxu0 0.0
    %357 = vmatpush1.xpose.msra.mxu0 0.0
    %358 = vmatprep.subr.mxu0 0.0
    %359 = vmatpush1.xpose.msra.mxu0 0.0
    %360 = vmatprep.subr.mxu0 0.0
    %361 = vmatpush1.xpose.msra.mxu0 0.0
    %362 = vmatprep.subr.mxu0 0.0
    %363 = vmatpush1.xpose.msra.mxu0 0.0
    %364 = vmatprep.subr.mxu0 0.0
    %365 = vmatpush1.xpose.msra.mxu0 0.0
    %366 = vmatprep.subr.mxu0 0.0
    %367 = vmatpush1.xpose.msra.mxu0 0.0
    %368 = vmatprep.subr.mxu0 0.0
    %369 = vmatpush1.xpose.msra.mxu0 0.0
    %370 = vmatprep.subr.mxu0 0.0
    %371 = vmatpush1.xpose.msra.mxu0 0.0
    %372 = vmatprep.subr.mxu0 0.0
    %373 = vmatpush1.xpose.msra.mxu0 0.0
    %374 = vmatprep.subr.mxu0 0.0
    %375 = vmatpush1.xpose.msra.mxu0 0.0
    %376 = vmatprep.subr.mxu0 0.0
    %377 = vmatpush1.xpose.msra.mxu0 0.0
    %378 = vmatprep.subr.mxu0 0.0
    %379 = vmatpush1.xpose.msra.mxu0 0.0
    %380 = vmatprep.subr.mxu0 0.0
    %381 = vmatpush1.xpose.msra.mxu0 0.0
    %382 = vmatprep.subr.mxu0 0.0
    %383 = vmatpush1.xpose.msra.mxu0 0.0
    %384 = vmatprep.subr.mxu0 0.0
    %385 = vmatpush1.xpose.msra.mxu0 0.0
    %386 = vmatprep.subr.mxu0 0.0
    %387 = vmatpush1.xpose.msra.mxu0 0.0
    %388 = vmatprep.subr.mxu0 0.0
    %389 = vmatpush1.xpose.msra.mxu0 0.0
    %390 = vmatprep.subr.mxu0 0.0
    %391 = vmatpush1.xpose.msra.mxu0 0.0
    %392 = vmatprep.subr.mxu0 0.0
    %393 = vmatpush1.xpose.msra.mxu0 0.0
    %394 = vmatprep.subr.mxu0 0.0
    %395 = vmatpush1.xpose.msra.mxu0 0.0
    %396 = vmatprep.subr.mxu0 0.0
    %397 = vmatpush1.xpose.msra.mxu0 0.0
    %398 = vmatprep.subr.mxu0 0.0
    %399 = vmatpush1.xpose.msra.mxu0 0.0
    %400 = vmatprep.subr.mxu0 0.0
    %401 = vmatpush1.xpose.msra.mxu0 0.0
    %402 = vmatprep.subr.mxu0 0.0
    %403 = vmatpush1.xpose.msra.mxu0 0.0
    %404 = vmatprep.subr.mxu0 0.0
    %405 = vmatpush1.xpose.msra.mxu0 0.0
    %406 = vmatprep.subr.mxu0 0.0
    %407 = vmatpush1.xpose.msra.mxu0 0.0
    %408 = vmatprep.subr.mxu0 0.0
    %409 = vmatpush1.xpose.msra.mxu0 0.0
    %410 = vmatprep.mubr.f32.mxu0 0.0
    %411 = vmatmul.mubr.f32.gmra.mrb[0].mxu0 %v248
    %v412 = vpop.f32.mrb[0].mxu0
    %v413 = vadd.f32 %v89, %v412
    %v414 = vpop.f32.mrb[0].mxu0
    %415 = vmatprep.mubr.f32.mxu0 0.0
    %416 = vmatmul.mubr.f32.gmra.mrb[0].mxu0 %v251
    %v417 = vpop.f32.mrb[0].mxu0
    %v418 = vadd.f32 %v94, %v417
    %v419 = vpop.f32.mrb[0].mxu0
    %420 = vmatprep.mubr.f32.mxu0 0.0
    %421 = vmatmul.mubr.f32.gmra.mrb[0].mxu0 %v254
    %v422 = vpop.f32.mrb[0].mxu0
    %v423 = vadd.f32 %v99, %v422
    %v424 = vpop.f32.mrb[0].mxu0
    %425 = vmatprep.mubr.f32.mxu0 0.0
    %426 = vmatmul.mubr.f32.gmra.mrb[0].mxu0 %v257
    %v427 = vpop.f32.mrb[0].mxu0
    %v428 = vadd.f32 %v104, %v427
    %v429 = vpop.f32.mrb[0].mxu0
    %430 = vmatprep.mubr.f32.mxu0 0.0
    %431 = vmatmul.mubr.f32.gmra.mrb[0].mxu0 %v260
    %v432 = vpop.f32.mrb[0].mxu0
    %v433 = vadd.f32 %v109, %v432
    %v434 = vpop.f32.mrb[0].mxu0
    %435 = vmatprep.mubr.f32.mxu0 0.0
    %436 = vmatmul.mubr.f32.gmra.mrb[0].mxu0 %v263
    %v437 = vpop.f32.mrb[0].mxu0
    %v438 = vadd.f32 %v114, %v437
    %v439 = vpop.f32.mrb[0].mxu0
    %440 = vmatprep.mubr.f32.mxu0 0.0
    %441 = vmatmul.mubr.f32.gmra.mrb[0].mxu0 %v266
    %v442 = vpop.f32.mrb[0].mxu0
    %v443 = vadd.f32 %v119, %v442
    %v444 = vpop.f32.mrb[0].mxu0
    %445 = vmatprep.mubr.f32.mxu0 0.0
    %446 = vmatmul.mubr.f32.gmra.mrb[0].mxu0 %v269
    %v447 = vpop.f32.mrb[0].mxu0
    %v448 = vadd.f32 %v124, %v447
    %v449 = vpop.f32.mrb[0].mxu0
    %450 = vmatprep.mubr.f32.mxu0 0.0
    %451 = vmatmul.mubr.f32.gmra.mrb[0].mxu0 %v272
    %v452 = vpop.f32.mrb[0].mxu0
    %v453 = vadd.f32 %v129, %v452
    %v454 = vpop.f32.mrb[0].mxu0
    %455 = vmatprep.mubr.f32.mxu0 0.0
    %456 = vmatmul.mubr.f32.gmra.mrb[0].mxu0 %v275
    %v457 = vpop.f32.mrb[0].mxu0
    %v458 = vadd.f32 %v134, %v457
    %v459 = vpop.f32.mrb[0].mxu0
    %460 = vmatprep.mubr.f32.mxu0 0.0
    %461 = vmatmul.mubr.f32.gmra.mrb[0].mxu0 %v278
    %v462 = vpop.f32.mrb[0].mxu0
    %v463 = vadd.f32 %v139, %v462
    %v464 = vpop.f32.mrb[0].mxu0
    %465 = vmatprep.mubr.f32.mxu0 0.0
    %466 = vmatmul.mubr.f32.gmra.mrb[0].mxu0 %v281
    %v467 = vpop.f32.mrb[0].mxu0
    %v468 = vadd.f32 %v144, %v467
    %v469 = vpop.f32.mrb[0].mxu0
    %470 = vmatprep.mubr.f32.mxu0 0.0
    %471 = vmatmul.mubr.f32.gmra.mrb[0].mxu0 %v284
    %v472 = vpop.f32.mrb[0].mxu0
    %v473 = vadd.f32 %v149, %v472
    %v474 = vpop.f32.mrb[0].mxu0
    %475 = vmatprep.mubr.f32.mxu0 0.0
    %476 = vmatmul.mubr.f32.gmra.mrb[0].mxu0 %v287
    %v477 = vpop.f32.mrb[0].mxu0
    %v478 = vadd.f32 %v154, %v477
    %v479 = vpop.f32.mrb[0].mxu0
    %480 = vmatprep.mubr.f32.mxu0 0.0
    %481 = vmatmul.mubr.f32.gmra.mrb[0].mxu0 %v290
    %v482 = vpop.f32.mrb[0].mxu0
    %v483 = vadd.f32 %v159, %v482
    %v484 = vpop.f32.mrb[0].mxu0
    %485 = vmatprep.mubr.f32.mxu0 0.0
    %486 = vmatmul.mubr.f32.gmra.mrb[0].mxu0 %v293
    %v487 = vpop.f32.mrb[0].mxu0
    %v488 = vadd.f32 %v164, %v487
    %v489 = vpop.f32.mrb[0].mxu0
    %490 = vmatprep.mubr.f32.mxu0 0.0
    %491 = vmatmul.mubr.f32.gmra.mrb[0].mxu0 %v296
    %v492 = vpop.f32.mrb[0].mxu0
    %v493 = vadd.f32 %v169, %v492
    %v494 = vpop.f32.mrb[0].mxu0
    %495 = vmatprep.mubr.f32.mxu0 0.0
    %496 = vmatmul.mubr.f32.gmra.mrb[0].mxu0 %v299
    %v497 = vpop.f32.mrb[0].mxu0
    %v498 = vadd.f32 %v174, %v497
    %v499 = vpop.f32.mrb[0].mxu0
    %500 = vmatprep.mubr.f32.mxu0 0.0
    %501 = vmatmul.mubr.f32.gmra.mrb[0].mxu0 %v302
    %v502 = vpop.f32.mrb[0].mxu0
    %v503 = vadd.f32 %v179, %v502
    %v504 = vpop.f32.mrb[0].mxu0
    %505 = vmatprep.mubr.f32.mxu0 0.0
    %506 = vmatmul.mubr.f32.gmra.mrb[0].mxu0 %v305
    %v507 = vpop.f32.mrb[0].mxu0
    %v508 = vadd.f32 %v184, %v507
    %v509 = vpop.f32.mrb[0].mxu0
    %510 = vmatprep.mubr.f32.mxu0 0.0
    %511 = vmatmul.mubr.f32.gmra.mrb[0].mxu0 %v308
    %v512 = vpop.f32.mrb[0].mxu0
    %v513 = vadd.f32 %v189, %v512
    %v514 = vpop.f32.mrb[0].mxu0
    %515 = vmatprep.mubr.f32.mxu0 0.0
    %516 = vmatmul.mubr.f32.gmra.mrb[0].mxu0 %v311
    %v517 = vpop.f32.mrb[0].mxu0
    %v518 = vadd.f32 %v194, %v517
    %v519 = vpop.f32.mrb[0].mxu0
    %520 = vmatprep.mubr.f32.mxu0 0.0
    %521 = vmatmul.mubr.f32.gmra.mrb[0].mxu0 %v314
    %v522 = vpop.f32.mrb[0].mxu0
    %v523 = vadd.f32 %v199, %v522
    %v524 = vpop.f32.mrb[0].mxu0
    %525 = vmatprep.mubr.f32.mxu0 0.0
    %526 = vmatmul.mubr.f32.gmra.mrb[0].mxu0 %v317
    %v527 = vpop.f32.mrb[0].mxu0
    %v528 = vadd.f32 %v204, %v527
    %v529 = vpop.f32.mrb[0].mxu0
    %530 = vmatprep.mubr.f32.mxu0 0.0
    %531 = vmatmul.mubr.f32.gmra.mrb[0].mxu0 %v320
    %v532 = vpop.f32.mrb[0].mxu0
    %v533 = vadd.f32 %v209, %v532
    %v534 = vpop.f32.mrb[0].mxu0
    %535 = vmatprep.mubr.f32.mxu0 0.0
    %536 = vmatmul.mubr.f32.gmra.mrb[0].mxu0 %v323
    %v537 = vpop.f32.mrb[0].mxu0
    %v538 = vadd.f32 %v214, %v537
    %v539 = vpop.f32.mrb[0].mxu0
    %540 = vmatprep.mubr.f32.mxu0 0.0
    %541 = vmatmul.mubr.f32.gmra.mrb[0].mxu0 %v326
    %v542 = vpop.f32.mrb[0].mxu0
    %v543 = vadd.f32 %v219, %v542
    %v544 = vpop.f32.mrb[0].mxu0
    %545 = vmatprep.mubr.f32.mxu0 0.0
    %546 = vmatmul.mubr.f32.gmra.mrb[0].mxu0 %v329
    %v547 = vpop.f32.mrb[0].mxu0
    %v548 = vadd.f32 %v224, %v547
    %v549 = vpop.f32.mrb[0].mxu0
    %550 = vmatprep.mubr.f32.mxu0 0.0
    %551 = vmatmul.mubr.f32.gmra.mrb[0].mxu0 %v332
    %v552 = vpop.f32.mrb[0].mxu0
    %v553 = vadd.f32 %v229, %v552
    %v554 = vpop.f32.mrb[0].mxu0
    %555 = vmatprep.mubr.f32.mxu0 0.0
    %556 = vmatmul.mubr.f32.gmra.mrb[0].mxu0 %v335
    %v557 = vpop.f32.mrb[0].mxu0
    %v558 = vadd.f32 %v234, %v557
    %v559 = vpop.f32.mrb[0].mxu0
    %560 = vmatprep.mubr.f32.mxu0 0.0
    %561 = vmatmul.mubr.f32.gmra.mrb[0].mxu0 %v338
    %v562 = vpop.f32.mrb[0].mxu0
    %v563 = vadd.f32 %v239, %v562
    %v564 = vpop.f32.mrb[0].mxu0
    %565 = vmatprep.mubr.f32.mxu0 0.0
    %566 = vmatmul.mubr.f32.gmra.mrb[0].mxu0 %v341
    %v567 = vpop.f32.mrb[0].mxu0
    %v568 = vadd.f32 %v244, %v567
    %v569 = vpop.f32.mrb[0].mxu0
    %570 = vdwg.mxu0
    %v571 = vtanh.pop %v413
    %v572 = vtanh.pop %v418
    %v573 = vtanh.pop %v423
    %v574 = vtanh.pop %v428
    %v575 = vtanh.pop %v433
    %v576 = vtanh.pop %v438
    %v577 = vtanh.pop %v443
    %v578 = vtanh.pop %v448
    %v579 = vtanh.pop %v453
    %v580 = vtanh.pop %v458
    %v581 = vtanh.pop %v463
    %v582 = vtanh.pop %v468
    %v583 = vtanh.pop %v473
    %v584 = vtanh.pop %v478
    %v585 = vtanh.pop %v483
    %v586 = vtanh.pop %v488
    %v587 = vtanh.pop %v493
    %v588 = vtanh.pop %v498
    %v589 = vtanh.pop %v503
    %v590 = vtanh.pop %v508
    %v591 = vtanh.pop %v513
    %v592 = vtanh.pop %v518
    %v593 = vtanh.pop %v523
    %v594 = vtanh.pop %v528
    %v595 = vtanh.pop %v533
    %v596 = vtanh.pop %v538
    %v597 = vtanh.pop %v543
    %v598 = vtanh.pop %v548
    %v599 = vtanh.pop %v553
    %v600 = vtanh.pop %v558
    %v601 = vtanh.pop %v563
    %v602 = vtanh.pop %v568
    %v603 = vld [vmem:[%s3] sm:$0xff]
    %v604 = vld [vmem:[%s4] sm:$0xf]
    %606 = vset.pattern.permute.xlu0 0
    %607 = vperm.xlu0 %606, %v604
    %v608 = vpop.permute.xlu0 %607
    %v611 = vcombine.high %v603, %v603
    %613 = vmatprep.subr.mxu0 0.0
    %614 = vmatpush1.msra.mxu0 %v571
    %615 = vmatprep.subr.mxu0 0.0
    %616 = vmatpush1.msra.mxu0 %v572
    %617 = vmatprep.subr.mxu0 0.0
    %618 = vmatpush1.msra.mxu0 %v573
    %619 = vmatprep.subr.mxu0 0.0
    %620 = vmatpush1.msra.mxu0 %v574
    %621 = vmatprep.subr.mxu0 0.0
    %622 = vmatpush1.msra.mxu0 %v575
    %623 = vmatprep.subr.mxu0 0.0
    %624 = vmatpush1.msra.mxu0 %v576
    %625 = vmatprep.subr.mxu0 0.0
    %626 = vmatpush1.msra.mxu0 %v577
    %627 = vmatprep.subr.mxu0 0.0
    %628 = vmatpush1.msra.mxu0 %v578
    %629 = vmatprep.subr.mxu0 0.0
    %630 = vmatpush1.msra.mxu0 %v579
    %631 = vmatprep.subr.mxu0 0.0
    %632 = vmatpush1.msra.mxu0 %v580
    %633 = vmatprep.subr.mxu0 0.0
    %634 = vmatpush1.msra.mxu0 %v581
    %635 = vmatprep.subr.mxu0 0.0
    %636 = vmatpush1.msra.mxu0 %v582
    %637 = vmatprep.subr.mxu0 0.0
    %638 = vmatpush1.msra.mxu0 %v583
    %639 = vmatprep.subr.mxu0 0.0
    %640 = vmatpush1.msra.mxu0 %v584
    %641 = vmatprep.subr.mxu0 0.0
    %642 = vmatpush1.msra.mxu0 %v585
    %643 = vmatprep.subr.mxu0 0.0
    %644 = vmatpush1.msra.mxu0 %v586
    %645 = vmatprep.subr.mxu0 0.0
    %646 = vmatpush1.msra.mxu0 %v587
    %647 = vmatprep.subr.mxu0 0.0
    %648 = vmatpush1.msra.mxu0 %v588
    %649 = vmatprep.subr.mxu0 0.0
    %650 = vmatpush1.msra.mxu0 %v589
    %651 = vmatprep.subr.mxu0 0.0
    %652 = vmatpush1.msra.mxu0 %v590
    %653 = vmatprep.subr.mxu0 0.0
    %654 = vmatpush1.msra.mxu0 %v591
    %655 = vmatprep.subr.mxu0 0.0
    %656 = vmatpush1.msra.mxu0 %v592
    %657 = vmatprep.subr.mxu0 0.0
    %658 = vmatpush1.msra.mxu0 %v593
    %659 = vmatprep.subr.mxu0 0.0
    %660 = vmatpush1.msra.mxu0 %v594
    %661 = vmatprep.subr.mxu0 0.0
    %662 = vmatpush1.msra.mxu0 %v595
    %663 = vmatprep.subr.mxu0 0.0
    %664 = vmatpush1.msra.mxu0 %v596
    %665 = vmatprep.subr.mxu0 0.0
    %666 = vmatpush1.msra.mxu0 %v597
    %667 = vmatprep.subr.mxu0 0.0
    %668 = vmatpush1.msra.mxu0 %v598
    %669 = vmatprep.subr.mxu0 0.0
    %670 = vmatpush1.msra.mxu0 %v599
    %671 = vmatprep.subr.mxu0 0.0
    %672 = vmatpush1.msra.mxu0 %v600
    %673 = vmatprep.subr.mxu0 0.0
    %674 = vmatpush1.msra.mxu0 %v601
    %675 = vmatprep.subr.mxu0 0.0
    %676 = vmatpush1.msra.mxu0 %v602
    %677 = vmatprep.mubr.f32.mxu0 %v611
    %678 = vmatmul.mubr.f32.gmra.mrb[0].mxu0 %v603
    %v679 = vpop.f32.mrb[0].mxu0
    %v680 = vadd.f32 %v608, %v679
    %v681 = vpop.f32.mrb[0].mxu0
    %682 = vdwg.mxu0
    %vm683 = vcmask 60416
    %v684 = vsel %vm683, %v680, -inf
    %685 = vmax.xlane.f32.xlu0 %v684
    %v686 = vpop.xlane.xlu0 %685
    %v687 = vsub.f32 %v680, %v686
    %v688 = vmul.f32 %v687, 1.442695
    %v689 = vpow.pop %v688
    %v690 = vsel %vm683, %v689, 0.0
    %691 = vadd.xlane.f32.xlu0 %v690
    %v692 = vpop.xlane.xlu0 %691
    %v693 = vrcp.pop %v692
    %v694 = vmul.f32 %v689, %v693
    %695 = vst.msk [vmem:[#allocation2] sm:$0xf] %vm683, %v694
    // Predicated region
    $region22: #{actor_forward.1} parent=1 // pred_check
      _
    $region23: #{actor_forward.1} parent=1 // pred_check_branch
      %697 = sbr.rel (0) target = $region25
    $region24: #{actor_forward.1} parent=1 // pred_region
      %s699 = ssub.s32 64, 64
      %700 = vsyncadd [#allocation3], %s699
      %s702 = sshll.u32 [#allocation2], 4
      %s703 = int_to_ptr.vmem [resolvable:$true] %s702
      %705 = dma.vmem_to_hbm [thread:$0]  %s703, 64, %s5, [#allocation3]
    $region25: #{actor_forward.1} parent=1 // pred_fallthru
      _
    // Predicated region
    $region26: #{actor_forward.1} parent=1 // pred_check
      _
    $region27: #{actor_forward.1} parent=1 // pred_check_branch
      %707 = sbr.rel (0) target = $region29
    $region28: #{actor_forward.1} parent=1 // pred_region
      %708 = dma.done [#allocation3], 64
    $region29: #{actor_forward.1} parent=1 // pred_fallthru
      _
    %709 = vsyncpa [#allocation3], 1

</llo_original>
